<compile_context>
chip_gen: v5e
topology: v5e:2x2
jax: 0.10.0
libtpu: 0.0.40
codegen_flags: <defaults>
</compile_context>

<pallas_src>
import math
import functools

import jax
import jax.numpy as jnp
from jax.experimental import pallas as pl
from jax.experimental.pallas import tpu as pltpu


def _round_up(x, m):
    return ((x + m - 1) // m) * m


@functools.lru_cache(maxsize=None)
def _vmem_capacity_bytes():
    # Physical VMEM per TensorCore: 128 MiB on v5e/v6e, 64 MiB on v7x.
    try:
        return int(pltpu.get_tpu_info().vmem_capacity_bytes)
    except Exception:
        return 64 << 20  # conservative fallback (v7x-sized)


def mlp_kernel(x_ref, w1t_ref, w2t_ref, o_ref, acc_ref):
    # x_ref: (tm, C) f32 | w1t_ref: (C, th) bf16 | w2t_ref: (th, C) bf16
    # o_ref: (tm, C)     | acc_ref: (tm, C) f32 scratch (persists over h axis)
    h_idx = pl.program_id(1)

    @pl.when(h_idx == 0)
    def _init():
        acc_ref[...] = jnp.zeros_like(acc_ref)

    x = x_ref[...].astype(jnp.bfloat16)          # bf16 MXU operands
    h = jnp.dot(x, w1t_ref[...], preferred_element_type=jnp.float32)
    # exact (erf) GELU — matches torch.nn.GELU() default
    h = 0.5 * h * (1.0 + jax.lax.erf(h * (1.0 / math.sqrt(2.0))))
    acc_ref[...] += jnp.dot(h.astype(jnp.bfloat16), w2t_ref[...],
                            preferred_element_type=jnp.float32)

    @pl.when(h_idx == pl.num_programs(1) - 1)
    def _finalize():
        # dropout: eval-mode identity
        o_ref[...] = acc_ref[...].astype(o_ref.dtype)


@functools.partial(jax.jit, static_argnames=("tm", "th"))
def mlp_forward(x, w1t, w2t, *, tm=512, th=None):
    """GPT MLP forward.

    x:   [B, T, C]
    w1t: [C, H] = c_fc.weight.T   (bf16, transposed/cast once at model load)
    w2t: [H, C] = c_proj.weight.T (bf16, transposed/cast once at model load)
    """
    B, T, C = x.shape
    H = w1t.shape[1]
    assert w1t.shape == (C, H) and w2t.shape == (H, C)
    M = B * T
    x_itemsize = jnp.dtype(x.dtype).itemsize
    w_itemsize = jnp.dtype(w1t.dtype).itemsize

    # ---- Row tile -----------------------------------------------------------
    # Multiple of 16 (bf16 sublane packing of the cast x tile).  Adaptive clamp
    # bounds padding / dead MXU rows to <16 per tile instead of up to tm-1.
    num_m_tiles = int(pl.cdiv(M, tm))
    tm = min(tm, _round_up(int(pl.cdiv(M, num_m_tiles)), 16))
    num_m_tiles = int(pl.cdiv(M, tm))
    M_pad = num_m_tiles * tm
    # TODO(synk): for tiny M on v7x, drop to 16-row tiles so num_m_tiles >= 2
    # and both TensorCores get work.

    x2 = x.reshape(M, C)
    if M_pad != M:
        # Bounded residual pad (zero rows are harmless: the MLP is per-row).
        x2 = jnp.pad(x2, ((0, M_pad - M), (0, 0)))

    # ---- Hidden-dim tile ----------------------------------------------------
    vmem_cap = _vmem_capacity_bytes()            # 128 MiB v5e/v6e, 64 MiB v7x
    budget = vmem_cap - (8 << 20)                # headroom for Mosaic scratch

    act_bytes = 2 * 2 * tm * C * x_itemsize + tm * C * 4  # x/out dbl-buf + acc

    def _fits(th_, nbuf):
        wt = nbuf * 2 * C * th_ * w_itemsize     # W1^T block + W2^T block
        inter = tm * th_ * 6                     # f32 + bf16 intermediate
        return wt + act_bytes + inter <= budget

    if th is None:
        if _fits(H, 1):
            th = H                               # weights fully resident
        else:
            # Production widths (v7x): stream H in MXU-friendly blocks.
            th = 256 if H % 256 == 0 else 128
    assert H % th == 0 and (th == H or th % 128 == 0), "th must divide H"
    num_h_tiles = H // th
    resident = num_h_tiles == 1

    # ---- Specs ----------------------------------------------------------------
    if resident:
        # Constant index_map + single buffer: no re-DMA, half the weight VMEM.
        w1_spec = pl.BlockSpec((C, th), lambda i, h: (0, 0),
                               pipeline_mode=pl.Buffered(1))
        w2_spec = pl.BlockSpec((th, C), lambda i, h: (0, 0),
                               pipeline_mode=pl.Buffered(1))
    else:
        w1_spec = pl.BlockSpec((C, th), lambda i, h: (0, h))
        w2_spec = pl.BlockSpec((th, C), lambda i, h: (h, 0))

    weight_vmem = (1 if resident else 2) * 2 * C * th * w_itemsize
    vmem_bytes = weight_vmem + act_bytes + tm * th * 6 + (8 << 20)
    vmem_bytes = int(max(min(vmem_bytes, vmem_cap - (4 << 20)), 32 << 20))

    cost = pl.CostEstimate(
        flops=4 * M_pad * C * H,                 # two matmuls, 2*M*C*H each
        transcendentals=0,                       # exact erf is a VPU polynomial
        bytes_accessed=2 * M_pad * C * x_itemsize + 2 * C * H * w_itemsize,
    )

    out2 = pl.pallas_call(
        mlp_kernel,
        out_shape=jax.ShapeDtypeStruct((M_pad, C), x.dtype),
        grid_spec=pltpu.PrefetchScalarGridSpec(
            num_scalar_prefetch=0,
            grid=(num_m_tiles, num_h_tiles),
            in_specs=[
                pl.BlockSpec((tm, C), lambda i, h: (i, 0)),   # streamed row tile
                w1_spec,
                w2_spec,
            ],
            out_specs=pl.BlockSpec((tm, C), lambda i, h: (i, 0)),
            scratch_shapes=[pltpu.VMEM((tm, C), jnp.float32)],
        ),
        compiler_params=pltpu.CompilerParams(
            dimension_semantics=("parallel", "arbitrary"),
            vmem_limit_bytes=vmem_bytes,
        ),
        cost_estimate=cost,
    )(x2, w1t, w2t)

    if M_pad != M:
        out2 = out2[:M]
    return out2.reshape(B, T, C)


def reference_mlp(x, w_fc, w_proj):
    # Pure-JAX f32 reference in the torch Linear weight layout (y = x @ W.T).
    h = jnp.einsum("btc,hc->bth", x, w_fc)
    h = 0.5 * h * (1.0 + jax.lax.erf(h / math.sqrt(2.0)))
    return jnp.einsum("bth,ch->btc", h, w_proj)


if __name__ == "__main__":
    # Small GPT-ish config with a lane-dense embed dim: n_embd=128, hidden=512.
    C = 128
    H = 4 * C

    key = jax.random.PRNGKey(0)
    kx1, kx2, kx3, k1, k2 = jax.random.split(key, 5)
    # torch Linear default init: U(-1/sqrt(fan_in), 1/sqrt(fan_in)), bias=False
    w_fc = jax.random.uniform(k1, (H, C), minval=-1.0 / math.sqrt(C),
                              maxval=1.0 / math.sqrt(C), dtype=jnp.float32)
    w_proj = jax.random.uniform(k2, (C, H), minval=-1.0 / math.sqrt(H),
                                maxval=1.0 / math.sqrt(H), dtype=jnp.float32)

    # One-time "model load" transpose + bf16 cast (off the per-call hot path).
    w1t = jnp.asarray(w_fc.T, dtype=jnp.bfloat16)     # [C, H]
    w2t = jnp.asarray(w_proj.T, dtype=jnp.bfloat16)   # [H, C]

    # bf16 MXU operands vs. the f32 exact reference -> loosened tolerance.
    TOL = dict(atol=2e-2, rtol=2e-2)

    # Case A: tile-aligned row count, resident-weight path.
    x_a = jax.random.normal(kx1, (2, 8, C), dtype=jnp.float32)
    out_a = mlp_forward(x_a, w1t, w2t)
    jax.block_until_ready(out_a)
    ref_a = reference_mlp(x_a, w_fc, w_proj)
    assert out_a.shape == x_a.shape
    assert jnp.allclose(out_a, ref_a, **TOL), "mismatch (case A)"

    # Case B: B*T not a multiple of 16 -> exercises the bounded padding path.
    x_b = jax.random.normal(kx2, (2, 13, C), dtype=jnp.float32)
    out_b = mlp_forward(x_b, w1t, w2t)
    jax.block_until_ready(out_b)
    ref_b = reference_mlp(x_b, w_fc, w_proj)
    assert out_b.shape == x_b.shape
    assert jnp.allclose(out_b, ref_b, **TOL), "mismatch (case B)"

    # Case C: multiple row tiles; also exercise the H-streaming (v7x
    # production) path with an explicit hidden tile.
    x_c = jax.random.normal(kx3, (4, 160, C), dtype=jnp.float32)
    out_c = mlp_forward(x_c, w1t, w2t)                   # resident weights
    out_c_stream = mlp_forward(x_c, w1t, w2t, th=256)    # 2 reduction steps
    jax.block_until_ready(out_c)
    jax.block_until_ready(out_c_stream)
    ref_c = reference_mlp(x_c, w_fc, w_proj)
    assert jnp.allclose(out_c, ref_c, **TOL), "mismatch (case C, resident)"
    assert jnp.allclose(out_c_stream, ref_c, **TOL), "mismatch (case C, H-streamed)"

    print("KERNEL_OK")
</pallas_src>

<mosaic_0001>
module attributes {stable_mosaic.version = 11 : i64} {
  func.func @mlp_kernel(%arg0: i32, %arg1: i32, %arg2: memref<16x128xf32, #tpu.memory_space<vmem>>, %arg3: memref<128x512xbf16, #tpu.memory_space<vmem>>, %arg4: memref<512x128xbf16, #tpu.memory_space<vmem>>, %arg5: memref<16x128xf32, #tpu.memory_space<vmem>>, %arg6: memref<16x128xf32, #tpu.memory_space<vmem>>) attributes {dimension_semantics = [#tpu.dimension_semantics<parallel>, #tpu.dimension_semantics<arbitrary>], iteration_bounds = array<i64: 1, 1>, scalar_prefetch = 0 : i64, scratch_operands = 1 : i64, tpu.core_type = #tpu.core_type<tc>, window_params = [{transform_indices = @transform_0, window_bounds = array<i64: 16, 128>}, {pipeline_mode = #tpu.pipeline_mode<synchronous>, transform_indices = @transform_1, window_bounds = array<i64: 128, 512>}, {pipeline_mode = #tpu.pipeline_mode<synchronous>, transform_indices = @transform_2, window_bounds = array<i64: 512, 128>}, {transform_indices = @transform_3, window_bounds = array<i64: 16, 128>}]} {
    %c0_i32 = arith.constant 0 : i32
    %0 = arith.cmpi eq, %arg1, %c0_i32 : i32
    %1 = arith.extui %0 : i1 to i32
    %c0_i32_0 = arith.constant 0 : i32
    %2 = arith.cmpi ne, %1, %c0_i32_0 : i32
    scf.if %2 {
      %cst_16 = arith.constant 0.000000e+00 : f32
      %24 = vector.broadcast %cst_16 : f32 to vector<16x128xf32>
      %c0_17 = arith.constant 0 : index
      %c0_18 = arith.constant 0 : index
      %25 = vector.load %arg6[%c0_17, %c0_18] : memref<16x128xf32, #tpu.memory_space<vmem>>, vector<16x128xf32>
      tpu.vector_store %arg6[%c0_17, %c0_18], %24 {strides = array<i32>} : memref<16x128xf32, #tpu.memory_space<vmem>>, vector<16x128xf32>,
    } else {
    }
    %c0 = arith.constant 0 : index
    %c0_1 = arith.constant 0 : index
    %3 = vector.load %arg2[%c0, %c0_1] : memref<16x128xf32, #tpu.memory_space<vmem>>, vector<16x128xf32>
    %4 = arith.truncf %3 : vector<16x128xf32> to vector<16x128xbf16>
    %c0_2 = arith.constant 0 : index
    %c0_3 = arith.constant 0 : index
    %5 = vector.load %arg3[%c0_2, %c0_3] : memref<128x512xbf16, #tpu.memory_space<vmem>>, vector<128x512xbf16>
    %cst = arith.constant dense<0.000000e+00> : vector<16x512xf32>
    %6 = tpu.matmul %4, %5, %cst {dimension_numbers = #tpu.dot_dimension_numbers<[1], [0], [0], [1], [0, 0, 1, 1], [], []>} : vector<16x128xbf16>, vector<128x512xbf16>, vector<16x512xf32> -> vector<16x512xf32>
    %cst_4 = arith.constant 5.000000e-01 : f32
    %7 = vector.broadcast %cst_4 : f32 to vector<16x512xf32>
    %8 = arith.mulf %7, %6 : vector<16x512xf32>
    %cst_5 = arith.constant 0.707106769 : f32
    %9 = vector.broadcast %cst_5 : f32 to vector<16x512xf32>
    %10 = arith.mulf %6, %9 : vector<16x512xf32>
    %11 = math.erf %10 : vector<16x512xf32>
    %cst_6 = arith.constant 1.000000e+00 : f32
    %12 = vector.broadcast %cst_6 : f32 to vector<16x512xf32>
    %13 = arith.addf %12, %11 : vector<16x512xf32>
    %14 = arith.mulf %8, %13 : vector<16x512xf32>
    %c0_7 = arith.constant 0 : index
    %c0_8 = arith.constant 0 : index
    %15 = vector.load %arg6[%c0_7, %c0_8] : memref<16x128xf32, #tpu.memory_space<vmem>>, vector<16x128xf32>
    %16 = arith.truncf %14 : vector<16x512xf32> to vector<16x512xbf16>
    %c0_9 = arith.constant 0 : index
    %c0_10 = arith.constant 0 : index
    %17 = vector.load %arg4[%c0_9, %c0_10] : memref<512x128xbf16, #tpu.memory_space<vmem>>, vector<512x128xbf16>
    %cst_11 = arith.constant dense<0.000000e+00> : vector<16x128xf32>
    %18 = tpu.matmul %16, %17, %cst_11 {dimension_numbers = #tpu.dot_dimension_numbers<[1], [0], [0], [1], [0, 0, 1, 1], [], []>} : vector<16x512xbf16>, vector<512x128xbf16>, vector<16x128xf32> -> vector<16x128xf32>
    %19 = arith.addf %15, %18 : vector<16x128xf32>
    %c0_12 = arith.constant 0 : index
    %c0_13 = arith.constant 0 : index
    %20 = vector.load %arg6[%c0_12, %c0_13] : memref<16x128xf32, #tpu.memory_space<vmem>>, vector<16x128xf32>
    tpu.vector_store %arg6[%c0_12, %c0_13], %19 {strides = array<i32>} : memref<16x128xf32, #tpu.memory_space<vmem>>, vector<16x128xf32>,
    %c0_i32_14 = arith.constant 0 : i32
    %21 = arith.cmpi eq, %arg1, %c0_i32_14 : i32
    %22 = arith.extui %21 : i1 to i32
    %c0_i32_15 = arith.constant 0 : i32
    %23 = arith.cmpi ne, %22, %c0_i32_15 : i32
    scf.if %23 {
      %c0_16 = arith.constant 0 : index
      %c0_17 = arith.constant 0 : index
      %24 = vector.load %arg6[%c0_16, %c0_17] : memref<16x128xf32, #tpu.memory_space<vmem>>, vector<16x128xf32>
      %c0_18 = arith.constant 0 : index
      %c0_19 = arith.constant 0 : index
      %25 = vector.load %arg5[%c0_18, %c0_19] : memref<16x128xf32, #tpu.memory_space<vmem>>, vector<16x128xf32>
      tpu.vector_store %arg5[%c0_18, %c0_19], %24 {strides = array<i32>} : memref<16x128xf32, #tpu.memory_space<vmem>>, vector<16x128xf32>,
    } else {
    }
    return
  }
  func.func @transform_0(%arg0: i32, %arg1: i32) -> (i32, i32) {
    %c0_i32 = arith.constant 0 : i32
    %c0_i32_0 = arith.constant 0 : i32
    return %arg0, %c0_i32 : i32, i32
  }
  func.func @transform_1(%arg0: i32, %arg1: i32) -> (i32, i32) {
    %c0_i32 = arith.constant 0 : i32
    %c0_i32_0 = arith.constant 0 : i32
    %c0_i32_1 = arith.constant 0 : i32
    return %c0_i32, %c0_i32_0 : i32, i32
  }
  func.func @transform_2(%arg0: i32, %arg1: i32) -> (i32, i32) {
    %c0_i32 = arith.constant 0 : i32
    %c0_i32_0 = arith.constant 0 : i32
    %c0_i32_1 = arith.constant 0 : i32
    return %c0_i32, %c0_i32_0 : i32, i32
  }
  func.func @transform_3(%arg0: i32, %arg1: i32) -> (i32, i32) {
    %c0_i32 = arith.constant 0 : i32
    %c0_i32_0 = arith.constant 0 : i32
    return %arg0, %c0_i32 : i32, i32
  }
}

</mosaic_0001>

<llo_original>
// kernel: mlp_forward.1
$region0: #{mlp_forward.1}
  #allocation0 [shape = 'u32[]', space=smem, size = 0x4, offset = 0x4, fixed_abs, tag = 'smem constant byte address 0x4 - core index']
  #allocation1 [shape = 'u32[72,128]{1,0:T(1,128)}', space=vmem, size = 0x9000, scoped, tag = 'internal scratch']
  #allocation2 [shape = 'f32[16,128]{1,0:T(8,128)}', space=vmem, size = 0x2000, scoped, tag = 'scratch operand']
  %s0 = inlined_call_operand.hbm [shape: f32[16,128], index: 0, kind: input, shape index: {}]
  %s1 = inlined_call_operand.hbm [shape: bf16[128,512], index: 1, kind: input, shape index: {}]
  %s2 = inlined_call_operand.hbm [shape: bf16[512,128], index: 2, kind: input, shape index: {}]
  %s3 = inlined_call_operand.hbm [shape: f32[16,128], index: 3, kind: output, shape index: {}]
  %s4 = sld [smem:[#allocation0]]
  $region42: #{mlp_forward.1} parent=0
    _
  %s6 = ssub.s32 1, %s4
  %s7 = scalar_select 0, %s6, %s4
  $region1: #{mlp_forward.1} parent=0
    #allocation3 [shape = 'u8[8192]{0}', space=vmem, size = 0x2000, scoped, tag = 'input window, operand 0, single buffered']
    #allocation4 [shape = 's32[1]{0}', space=sflag, size = 0x4, scoped, tag = 'scoped memory for mlp_forward.1']
    #allocation5 [shape = 's32[1]{0}', space=sflag, size = 0x4, scoped, tag = 'scoped memory for mlp_forward.1']
    #allocation6 [shape = 'u8[131072]{0}', space=vmem, size = 0x20000, scoped, tag = 'input window, operand 1, single buffered']
    #allocation7 [shape = 's32[1]{0}', space=sflag, size = 0x4, scoped, tag = 'scoped memory for mlp_forward.1']
    #allocation8 [shape = 'u8[131072]{0}', space=vmem, size = 0x20000, scoped, tag = 'input window, operand 2, single buffered']
    #allocation9 [shape = 'u8[8192]{0}', space=vmem, size = 0x2000, scoped, tag = 'output window, operand 0, single buffered']
    %8 = vsyncpa [#allocation4], 0
    %9 = vsyncpa [#allocation7], 0
    %10 = vsyncpa [#allocation5], 0
    // Predicated region
    $region2: #{mlp_forward.1} parent=1 // pred_check
      _
    $region3: #{mlp_forward.1} parent=1 // pred_check_branch
      %12 = sbr.rel (0) target = $region5
    $region4: #{mlp_forward.1} parent=1 // pred_region
      %14 = vsyncadd [#allocation4], 0
      %s15 = sshll.u32 %s0, 4
      %s16 = int_to_ptr.hbm [resolvable:$true] %s15
      %s17 = sshll.u32 [#allocation3], 4
      %s18 = int_to_ptr.vmem [resolvable:$true] %s17
      %23 = dma.hbm_to_vmem [thread:$0]  %s16, 256, %s18, [#allocation4], 128, 128, 8
    $region5: #{mlp_forward.1} parent=1 // pred_fallthru
      _
    // Predicated region
    $region6: #{mlp_forward.1} parent=1 // pred_check
      _
    $region7: #{mlp_forward.1} parent=1 // pred_check_branch
      %25 = sbr.rel (0) target = $region9
    $region8: #{mlp_forward.1} parent=1 // pred_region
      %27 = vsyncadd [#allocation7], 0
      %s28 = sshll.u32 %s1, 4
      %s29 = int_to_ptr.hbm [resolvable:$true] %s28
      %s30 = sshll.u32 [#allocation6], 4
      %s31 = int_to_ptr.vmem [resolvable:$true] %s30
      %36 = dma.hbm_to_vmem [thread:$0]  %s29, 4096, %s31, [#allocation7], 256, 256, 16
    $region9: #{mlp_forward.1} parent=1 // pred_fallthru
      _
    // Predicated region
    $region10: #{mlp_forward.1} parent=1 // pred_check
      _
    $region11: #{mlp_forward.1} parent=1 // pred_check_branch
      %38 = sbr.rel (0) target = $region13
    $region12: #{mlp_forward.1} parent=1 // pred_region
      %40 = vsyncadd [#allocation7], 0
      %s41 = sshll.u32 %s2, 4
      %s42 = int_to_ptr.hbm [resolvable:$true] %s41
      %s43 = sshll.u32 [#allocation8], 4
      %s44 = int_to_ptr.vmem [resolvable:$true] %s43
      %49 = dma.hbm_to_vmem [thread:$0]  %s42, 4096, %s44, [#allocation7], 64, 64, 4
    $region13: #{mlp_forward.1} parent=1 // pred_fallthru
      _
    // Predicated region
    $region14: #{mlp_forward.1} parent=1 // pred_check
      _
    $region15: #{mlp_forward.1} parent=1 // pred_check_branch
      %51 = sbr.rel (0) target = $region17
    $region16: #{mlp_forward.1} parent=1 // pred_region
      %53 = dma.done [#allocation4], 256
    $region17: #{mlp_forward.1} parent=1 // pred_fallthru
      _
    // Predicated region
    $region18: #{mlp_forward.1} parent=1 // pred_check
      _
    $region19: #{mlp_forward.1} parent=1 // pred_check_branch
      %55 = sbr.rel (0) target = $region21
    $region20: #{mlp_forward.1} parent=1 // pred_region
      %57 = dma.done [#allocation7], 4096
    $region21: #{mlp_forward.1} parent=1 // pred_fallthru
      _
    // Predicated region
    $region22: #{mlp_forward.1} parent=1 // pred_check
      _
    $region23: #{mlp_forward.1} parent=1 // pred_check_branch
      %59 = sbr.rel (0) target = $region25
    $region24: #{mlp_forward.1} parent=1 // pred_region
      %61 = dma.done [#allocation7], 4096
    $region25: #{mlp_forward.1} parent=1 // pred_fallthru
      _
    %p62 = scmp.eq.s32.totalorder 0, 0
    // Predicated region
    $region26: #{mlp_forward.1} parent=1 // pred_check
      %p63 = pneg %p62
    $region27: #{mlp_forward.1} parent=1 // pred_check_branch
      %65 = sbr.rel (%p63) target = $region29
    $region28: #{mlp_forward.1} parent=1 // pred_region
      %66 = vst [vmem:[#allocation2] sm:$0xff] 0.0
      %67 = vst [vmem:[#allocation2 + $0x8] sm:$0xff] 0.0
    $region29: #{mlp_forward.1} parent=1 // pred_fallthru
      _
    %v68 = vld [vmem:[#allocation3] sm:$0xff]
    %v69 = vld [vmem:[#allocation3 + $0x8] sm:$0xff]
    %v70 = vpack.c.bf16 %v69, %v68
    %v71 = vld [vmem:[#allocation6] sm:$0xff]
    %v72 = vld [vmem:[#allocation6 + $0x8] sm:$0xff]
    %v73 = vld [vmem:[#allocation6 + $0x10] sm:$0xff]
    %v74 = vld [vmem:[#allocation6 + $0x18] sm:$0xff]
    %v75 = vld [vmem:[#allocation6 + $0x20] sm:$0xff]
    %v76 = vld [vmem:[#allocation6 + $0x28] sm:$0xff]
    %v77 = vld [vmem:[#allocation6 + $0x30] sm:$0xff]
    %v78 = vld [vmem:[#allocation6 + $0x38] sm:$0xff]
    %v79 = vld [vmem:[#allocation6 + $0x40] sm:$0xff]
    %v80 = vld [vmem:[#allocation6 + $0x48] sm:$0xff]
    %v81 = vld [vmem:[#allocation6 + $0x50] sm:$0xff]
    %v82 = vld [vmem:[#allocation6 + $0x58] sm:$0xff]
    %v83 = vld [vmem:[#allocation6 + $0x60] sm:$0xff]
    %v84 = vld [vmem:[#allocation6 + $0x68] sm:$0xff]
    %v85 = vld [vmem:[#allocation6 + $0x70] sm:$0xff]
    %v86 = vld [vmem:[#allocation6 + $0x78] sm:$0xff]
    %v87 = vld [vmem:[#allocation6 + $0x80] sm:$0xff]
    %v88 = vld [vmem:[#allocation6 + $0x88] sm:$0xff]
    %v89 = vld [vmem:[#allocation6 + $0x90] sm:$0xff]
    %v90 = vld [vmem:[#allocation6 + $0x98] sm:$0xff]
    %v91 = vld [vmem:[#allocation6 + $0xa0] sm:$0xff]
    %v92 = vld [vmem:[#allocation6 + $0xa8] sm:$0xff]
    %v93 = vld [vmem:[#allocation6 + $0xb0] sm:$0xff]
    %v94 = vld [vmem:[#allocation6 + $0xb8] sm:$0xff]
    %v95 = vld [vmem:[#allocation6 + $0xc0] sm:$0xff]
    %v96 = vld [vmem:[#allocation6 + $0xc8] sm:$0xff]
    %v97 = vld [vmem:[#allocation6 + $0xd0] sm:$0xff]
    %v98 = vld [vmem:[#allocation6 + $0xd8] sm:$0xff]
    %v99 = vld [vmem:[#allocation6 + $0xe0] sm:$0xff]
    %v100 = vld [vmem:[#allocation6 + $0xe8] sm:$0xff]
    %v101 = vld [vmem:[#allocation6 + $0xf0] sm:$0xff]
    %v102 = vld [vmem:[#allocation6 + $0xf8] sm:$0xff]
    %v135 = vunpack.c.l.b16 %v71
    %v136 = vunpack.c.h.b16 %v71
    %v137 = vunpack.c.l.b16 %v72
    %v138 = vunpack.c.h.b16 %v72
    %v139 = vunpack.c.l.b16 %v73
    %v140 = vunpack.c.h.b16 %v73
    %v141 = vunpack.c.l.b16 %v74
    %v142 = vunpack.c.h.b16 %v74
    %v143 = vunpack.c.l.b16 %v75
    %v144 = vunpack.c.h.b16 %v75
    %v145 = vunpack.c.l.b16 %v76
    %v146 = vunpack.c.h.b16 %v76
    %v147 = vunpack.c.l.b16 %v77
    %v148 = vunpack.c.h.b16 %v77
    %v149 = vunpack.c.l.b16 %v78
    %v150 = vunpack.c.h.b16 %v78
    %v151 = vunpack.c.l.b16 %v79
    %v152 = vunpack.c.h.b16 %v79
    %v153 = vunpack.c.l.b16 %v80
    %v154 = vunpack.c.h.b16 %v80
    %v155 = vunpack.c.l.b16 %v81
    %v156 = vunpack.c.h.b16 %v81
    %v157 = vunpack.c.l.b16 %v82
    %v158 = vunpack.c.h.b16 %v82
    %v159 = vunpack.c.l.b16 %v83
    %v160 = vunpack.c.h.b16 %v83
    %v161 = vunpack.c.l.b16 %v84
    %v162 = vunpack.c.h.b16 %v84
    %v163 = vunpack.c.l.b16 %v85
    %v164 = vunpack.c.h.b16 %v85
    %v165 = vunpack.c.l.b16 %v86
    %v166 = vunpack.c.h.b16 %v86
    %v167 = vunpack.c.l.b16 %v87
    %v168 = vunpack.c.h.b16 %v87
    %v169 = vunpack.c.l.b16 %v88
    %v170 = vunpack.c.h.b16 %v88
    %v171 = vunpack.c.l.b16 %v89
    %v172 = vunpack.c.h.b16 %v89
    %v173 = vunpack.c.l.b16 %v90
    %v174 = vunpack.c.h.b16 %v90
    %v175 = vunpack.c.l.b16 %v91
    %v176 = vunpack.c.h.b16 %v91
    %v177 = vunpack.c.l.b16 %v92
    %v178 = vunpack.c.h.b16 %v92
    %v179 = vunpack.c.l.b16 %v93
    %v180 = vunpack.c.h.b16 %v93
    %v181 = vunpack.c.l.b16 %v94
    %v182 = vunpack.c.h.b16 %v94
    %v183 = vunpack.c.l.b16 %v95
    %v184 = vunpack.c.h.b16 %v95
    %v185 = vunpack.c.l.b16 %v96
    %v186 = vunpack.c.h.b16 %v96
    %v187 = vunpack.c.l.b16 %v97
    %v188 = vunpack.c.h.b16 %v97
    %v189 = vunpack.c.l.b16 %v98
    %v190 = vunpack.c.h.b16 %v98
    %v191 = vunpack.c.l.b16 %v99
    %v192 = vunpack.c.h.b16 %v99
    %v193 = vunpack.c.l.b16 %v100
    %v194 = vunpack.c.h.b16 %v100
    %v195 = vunpack.c.l.b16 %v101
    %v196 = vunpack.c.h.b16 %v101
    %v197 = vunpack.c.l.b16 %v102
    %v198 = vunpack.c.h.b16 %v102
    %v199 = vpack.c.b16 %v139, %v135
    %v200 = vpack.c.b16 %v140, %v136
    %v201 = vpack.c.b16 %v141, %v137
    %v202 = vpack.c.b16 %v142, %v138
    %v203 = vpack.c.b16 %v147, %v143
    %v204 = vpack.c.b16 %v148, %v144
    %v205 = vpack.c.b16 %v149, %v145
    %v206 = vpack.c.b16 %v150, %v146
    %v207 = vpack.c.b16 %v155, %v151
    %v208 = vpack.c.b16 %v156, %v152
    %v209 = vpack.c.b16 %v157, %v153
    %v210 = vpack.c.b16 %v158, %v154
    %v211 = vpack.c.b16 %v163, %v159
    %v212 = vpack.c.b16 %v164, %v160
    %v213 = vpack.c.b16 %v165, %v161
    %v214 = vpack.c.b16 %v166, %v162
    %v215 = vpack.c.b16 %v171, %v167
    %v216 = vpack.c.b16 %v172, %v168
    %v217 = vpack.c.b16 %v173, %v169
    %v218 = vpack.c.b16 %v174, %v170
    %v219 = vpack.c.b16 %v179, %v175
    %v220 = vpack.c.b16 %v180, %v176
    %v221 = vpack.c.b16 %v181, %v177
    %v222 = vpack.c.b16 %v182, %v178
    %v223 = vpack.c.b16 %v187, %v183
    %v224 = vpack.c.b16 %v188, %v184
    %v225 = vpack.c.b16 %v189, %v185
    %v226 = vpack.c.b16 %v190, %v186
    %v227 = vpack.c.b16 %v195, %v191
    %v228 = vpack.c.b16 %v196, %v192
    %v229 = vpack.c.b16 %v197, %v193
    %v230 = vpack.c.b16 %v198, %v194
    %263 = vmatpush.bf16.msra.mxu0 %v227
    %264 = vmatpush.bf16.msra.mxu0 %v223
    %265 = vmatpush.bf16.msra.mxu0 %v219
    %266 = vmatpush.bf16.msra.mxu0 %v215
    %267 = vmatpush.bf16.msra.mxu0 %v211
    %268 = vmatpush.bf16.msra.mxu0 %v207
    %269 = vmatpush.bf16.msra.mxu0 %v203
    %270 = vmatpush.bf16.msra.mxu0 %v199
    %271 = vmatmul.bf16.gmra.mxu0 %v70
    %v272 = vpop.f32.mrf.mxu0
    %v273 = vadd.f32 0.0, %v272
    %v274 = vpop.f32.mrf.mxu0
    %v275 = vadd.f32 0.0, %v274
    %276 = vdwg.mxu0
    %277 = vmatpush.bf16.msra.mxu0 %v228
    %278 = vmatpush.bf16.msra.mxu0 %v224
    %279 = vmatpush.bf16.msra.mxu0 %v220
    %280 = vmatpush.bf16.msra.mxu0 %v216
    %281 = vmatpush.bf16.msra.mxu0 %v212
    %282 = vmatpush.bf16.msra.mxu0 %v208
    %283 = vmatpush.bf16.msra.mxu0 %v204
    %284 = vmatpush.bf16.msra.mxu0 %v200
    %285 = vmatmul.bf16.gmra.mxu0 %v70
    %v286 = vpop.f32.mrf.mxu0
    %v287 = vadd.f32 0.0, %v286
    %v288 = vpop.f32.mrf.mxu0
    %v289 = vadd.f32 0.0, %v288
    %290 = vdwg.mxu0
    %291 = vmatpush.bf16.msra.mxu0 %v229
    %292 = vmatpush.bf16.msra.mxu0 %v225
    %293 = vmatpush.bf16.msra.mxu0 %v221
    %294 = vmatpush.bf16.msra.mxu0 %v217
    %295 = vmatpush.bf16.msra.mxu0 %v213
    %296 = vmatpush.bf16.msra.mxu0 %v209
    %297 = vmatpush.bf16.msra.mxu0 %v205
    %298 = vmatpush.bf16.msra.mxu0 %v201
    %299 = vmatmul.bf16.gmra.mxu0 %v70
    %v300 = vpop.f32.mrf.mxu0
    %v301 = vadd.f32 0.0, %v300
    %v302 = vpop.f32.mrf.mxu0
    %v303 = vadd.f32 0.0, %v302
    %304 = vdwg.mxu0
    %305 = vmatpush.bf16.msra.mxu0 %v230
    %306 = vmatpush.bf16.msra.mxu0 %v226
    %307 = vmatpush.bf16.msra.mxu0 %v222
    %308 = vmatpush.bf16.msra.mxu0 %v218
    %309 = vmatpush.bf16.msra.mxu0 %v214
    %310 = vmatpush.bf16.msra.mxu0 %v210
    %311 = vmatpush.bf16.msra.mxu0 %v206
    %312 = vmatpush.bf16.msra.mxu0 %v202
    %313 = vmatmul.bf16.gmra.mxu0 %v70
    %v314 = vpop.f32.mrf.mxu0
    %v315 = vadd.f32 0.0, %v314
    %v316 = vpop.f32.mrf.mxu0
    %v317 = vadd.f32 0.0, %v316
    %318 = vdwg.mxu0
    %v319 = vmul.f32 %v273, 0.5
    %v320 = vmul.f32 %v287, 0.5
    %v321 = vmul.f32 %v301, 0.5
    %v322 = vmul.f32 %v315, 0.5
    %v323 = vmul.f32 %v275, 0.5
    %v324 = vmul.f32 %v289, 0.5
    %v325 = vmul.f32 %v303, 0.5
    %v326 = vmul.f32 %v317, 0.5
    %v327 = vmul.f32 %v273, 0.70710677
    %v328 = vmul.f32 %v287, 0.70710677
    %v329 = vmul.f32 %v301, 0.70710677
    %v330 = vmul.f32 %v315, 0.70710677
    %v331 = vmul.f32 %v275, 0.70710677
    %v332 = vmul.f32 %v289, 0.70710677
    %v333 = vmul.f32 %v303, 0.70710677
    %v334 = vmul.f32 %v317, 0.70710677
    %v335 = vmul.f32 %v327, %v327
    %v336 = vmin.f32 16.0, %v335
    %v337 = vmul.f32 %v336, 2.1237322e-06
    %v338 = vadd.f32 %v337, 0.00028619796
    %v339 = vmul.f32 %v336, %v338
    %v340 = vadd.f32 %v339, 0.0036580483
    %v341 = vmul.f32 %v336, %v340
    %v342 = vadd.f32 %v341, 0.05243302
    %v343 = vmul.f32 %v336, %v342
    %v344 = vadd.f32 %v343, 0.18741608
    %v345 = vmul.f32 %v336, %v344
    %v346 = vadd.f32 %v345, 1.1283791
    %v347 = vmul.f32 %v327, %v346
    %v348 = vmul.f32 %v336, 3.8918573e-05
    %v349 = vadd.f32 %v348, 0.001143296
    %v350 = vmul.f32 %v336, %v349
    %v351 = vadd.f32 %v350, 0.014752088
    %v352 = vmul.f32 %v336, %v351
    %v353 = vadd.f32 %v352, 0.112945676
    %v354 = vmul.f32 %v336, %v353
    %v355 = vadd.f32 %v354, 0.4994258
    %v356 = vmul.f32 %v336, %v355
    %v357 = vadd.f32 %v356, 1.0
    %v358 = vrcp.pop %v357
    %v359 = vmul.f32 %v357, %v358
    %v360 = vsub.f32 1.0, %v359
    %v361 = vmul.f32 %v358, %v360
    %v362 = vadd.f32 %v358, %v361
    %vm363 = vweird.f32 %v357
    %vm364 = vweird.f32 %v358
    %vm365 = vmor %vm363, %vm364
    %v366 = vsel %vm365, %v358, %v362
    %v367 = vand.u32 2147483647, %v357
    %vm368 = vcmp.eq.f32.partialorder %v367, 8.507059e+37
    %v369 = vand.u32 %v357, 2147483648
    %v370 = vor.u32 1.1754944e-38, %v369
    %v371 = vsel %vm368, %v370, %v366
    %v372 = vmul.f32 %v347, %v371
    %v373 = vmin.f32 %v372, 1.0
    %v374 = vmax.f32 %v373, -1.0
    %v375 = vmul.f32 %v328, %v328
    %v376 = vmin.f32 16.0, %v375
    %v377 = vmul.f32 %v376, 2.1237322e-06
    %v378 = vadd.f32 %v377, 0.00028619796
    %v379 = vmul.f32 %v376, %v378
    %v380 = vadd.f32 %v379, 0.0036580483
    %v381 = vmul.f32 %v376, %v380
    %v382 = vadd.f32 %v381, 0.05243302
    %v383 = vmul.f32 %v376, %v382
    %v384 = vadd.f32 %v383, 0.18741608
    %v385 = vmul.f32 %v376, %v384
    %v386 = vadd.f32 %v385, 1.1283791
    %v387 = vmul.f32 %v328, %v386
    %v388 = vmul.f32 %v376, 3.8918573e-05
    %v389 = vadd.f32 %v388, 0.001143296
    %v390 = vmul.f32 %v376, %v389
    %v391 = vadd.f32 %v390, 0.014752088
    %v392 = vmul.f32 %v376, %v391
    %v393 = vadd.f32 %v392, 0.112945676
    %v394 = vmul.f32 %v376, %v393
    %v395 = vadd.f32 %v394, 0.4994258
    %v396 = vmul.f32 %v376, %v395
    %v397 = vadd.f32 %v396, 1.0
    %v398 = vrcp.pop %v397
    %v399 = vmul.f32 %v397, %v398
    %v400 = vsub.f32 1.0, %v399
    %v401 = vmul.f32 %v398, %v400
    %v402 = vadd.f32 %v398, %v401
    %vm403 = vweird.f32 %v397
    %vm404 = vweird.f32 %v398
    %vm405 = vmor %vm403, %vm404
    %v406 = vsel %vm405, %v398, %v402
    %v407 = vand.u32 2147483647, %v397
    %vm408 = vcmp.eq.f32.partialorder %v407, 8.507059e+37
    %v409 = vand.u32 %v397, 2147483648
    %v410 = vor.u32 1.1754944e-38, %v409
    %v411 = vsel %vm408, %v410, %v406
    %v412 = vmul.f32 %v387, %v411
    %v413 = vmin.f32 %v412, 1.0
    %v414 = vmax.f32 %v413, -1.0
    %v415 = vmul.f32 %v329, %v329
    %v416 = vmin.f32 16.0, %v415
    %v417 = vmul.f32 %v416, 2.1237322e-06
    %v418 = vadd.f32 %v417, 0.00028619796
    %v419 = vmul.f32 %v416, %v418
    %v420 = vadd.f32 %v419, 0.0036580483
    %v421 = vmul.f32 %v416, %v420
    %v422 = vadd.f32 %v421, 0.05243302
    %v423 = vmul.f32 %v416, %v422
    %v424 = vadd.f32 %v423, 0.18741608
    %v425 = vmul.f32 %v416, %v424
    %v426 = vadd.f32 %v425, 1.1283791
    %v427 = vmul.f32 %v329, %v426
    %v428 = vmul.f32 %v416, 3.8918573e-05
    %v429 = vadd.f32 %v428, 0.001143296
    %v430 = vmul.f32 %v416, %v429
    %v431 = vadd.f32 %v430, 0.014752088
    %v432 = vmul.f32 %v416, %v431
    %v433 = vadd.f32 %v432, 0.112945676
    %v434 = vmul.f32 %v416, %v433
    %v435 = vadd.f32 %v434, 0.4994258
    %v436 = vmul.f32 %v416, %v435
    %v437 = vadd.f32 %v436, 1.0
    %v438 = vrcp.pop %v437
    %v439 = vmul.f32 %v437, %v438
    %v440 = vsub.f32 1.0, %v439
    %v441 = vmul.f32 %v438, %v440
    %v442 = vadd.f32 %v438, %v441
    %vm443 = vweird.f32 %v437
    %vm444 = vweird.f32 %v438
    %vm445 = vmor %vm443, %vm444
    %v446 = vsel %vm445, %v438, %v442
    %v447 = vand.u32 2147483647, %v437
    %vm448 = vcmp.eq.f32.partialorder %v447, 8.507059e+37
    %v449 = vand.u32 %v437, 2147483648
    %v450 = vor.u32 1.1754944e-38, %v449
    %v451 = vsel %vm448, %v450, %v446
    %v452 = vmul.f32 %v427, %v451
    %v453 = vmin.f32 %v452, 1.0
    %v454 = vmax.f32 %v453, -1.0
    %v455 = vmul.f32 %v330, %v330
    %v456 = vmin.f32 16.0, %v455
    %v457 = vmul.f32 %v456, 2.1237322e-06
    %v458 = vadd.f32 %v457, 0.00028619796
    %v459 = vmul.f32 %v456, %v458
    %v460 = vadd.f32 %v459, 0.0036580483
    %v461 = vmul.f32 %v456, %v460
    %v462 = vadd.f32 %v461, 0.05243302
    %v463 = vmul.f32 %v456, %v462
    %v464 = vadd.f32 %v463, 0.18741608
    %v465 = vmul.f32 %v456, %v464
    %v466 = vadd.f32 %v465, 1.1283791
    %v467 = vmul.f32 %v330, %v466
    %v468 = vmul.f32 %v456, 3.8918573e-05
    %v469 = vadd.f32 %v468, 0.001143296
    %v470 = vmul.f32 %v456, %v469
    %v471 = vadd.f32 %v470, 0.014752088
    %v472 = vmul.f32 %v456, %v471
    %v473 = vadd.f32 %v472, 0.112945676
    %v474 = vmul.f32 %v456, %v473
    %v475 = vadd.f32 %v474, 0.4994258
    %v476 = vmul.f32 %v456, %v475
    %v477 = vadd.f32 %v476, 1.0
    %v478 = vrcp.pop %v477
    %v479 = vmul.f32 %v477, %v478
    %v480 = vsub.f32 1.0, %v479
    %v481 = vmul.f32 %v478, %v480
    %v482 = vadd.f32 %v478, %v481
    %vm483 = vweird.f32 %v477
    %vm484 = vweird.f32 %v478
    %vm485 = vmor %vm483, %vm484
    %v486 = vsel %vm485, %v478, %v482
    %v487 = vand.u32 2147483647, %v477
    %vm488 = vcmp.eq.f32.partialorder %v487, 8.507059e+37
    %v489 = vand.u32 %v477, 2147483648
    %v490 = vor.u32 1.1754944e-38, %v489
    %v491 = vsel %vm488, %v490, %v486
    %v492 = vmul.f32 %v467, %v491
    %v493 = vmin.f32 %v492, 1.0
    %v494 = vmax.f32 %v493, -1.0
    %v495 = vmul.f32 %v331, %v331
    %v496 = vmin.f32 16.0, %v495
    %v497 = vmul.f32 %v496, 2.1237322e-06
    %v498 = vadd.f32 %v497, 0.00028619796
    %v499 = vmul.f32 %v496, %v498
    %v500 = vadd.f32 %v499, 0.0036580483
    %v501 = vmul.f32 %v496, %v500
    %v502 = vadd.f32 %v501, 0.05243302
    %v503 = vmul.f32 %v496, %v502
    %v504 = vadd.f32 %v503, 0.18741608
    %v505 = vmul.f32 %v496, %v504
    %v506 = vadd.f32 %v505, 1.1283791
    %v507 = vmul.f32 %v331, %v506
    %v508 = vmul.f32 %v496, 3.8918573e-05
    %v509 = vadd.f32 %v508, 0.001143296
    %v510 = vmul.f32 %v496, %v509
    %v511 = vadd.f32 %v510, 0.014752088
    %v512 = vmul.f32 %v496, %v511
    %v513 = vadd.f32 %v512, 0.112945676
    %v514 = vmul.f32 %v496, %v513
    %v515 = vadd.f32 %v514, 0.4994258
    %v516 = vmul.f32 %v496, %v515
    %v517 = vadd.f32 %v516, 1.0
    %v518 = vrcp.pop %v517
    %v519 = vmul.f32 %v517, %v518
    %v520 = vsub.f32 1.0, %v519
    %v521 = vmul.f32 %v518, %v520
    %v522 = vadd.f32 %v518, %v521
    %vm523 = vweird.f32 %v517
    %vm524 = vweird.f32 %v518
    %vm525 = vmor %vm523, %vm524
    %v526 = vsel %vm525, %v518, %v522
    %v527 = vand.u32 2147483647, %v517
    %vm528 = vcmp.eq.f32.partialorder %v527, 8.507059e+37
    %v529 = vand.u32 %v517, 2147483648
    %v530 = vor.u32 1.1754944e-38, %v529
    %v531 = vsel %vm528, %v530, %v526
    %v532 = vmul.f32 %v507, %v531
    %v533 = vmin.f32 %v532, 1.0
    %v534 = vmax.f32 %v533, -1.0
    %v535 = vmul.f32 %v332, %v332
    %v536 = vmin.f32 16.0, %v535
    %v537 = vmul.f32 %v536, 2.1237322e-06
    %v538 = vadd.f32 %v537, 0.00028619796
    %v539 = vmul.f32 %v536, %v538
    %v540 = vadd.f32 %v539, 0.0036580483
    %v541 = vmul.f32 %v536, %v540
    %v542 = vadd.f32 %v541, 0.05243302
    %v543 = vmul.f32 %v536, %v542
    %v544 = vadd.f32 %v543, 0.18741608
    %v545 = vmul.f32 %v536, %v544
    %v546 = vadd.f32 %v545, 1.1283791
    %v547 = vmul.f32 %v332, %v546
    %v548 = vmul.f32 %v536, 3.8918573e-05
    %v549 = vadd.f32 %v548, 0.001143296
    %v550 = vmul.f32 %v536, %v549
    %v551 = vadd.f32 %v550, 0.014752088
    %v552 = vmul.f32 %v536, %v551
    %v553 = vadd.f32 %v552, 0.112945676
    %v554 = vmul.f32 %v536, %v553
    %v555 = vadd.f32 %v554, 0.4994258
    %v556 = vmul.f32 %v536, %v555
    %v557 = vadd.f32 %v556, 1.0
    %v558 = vrcp.pop %v557
    %v559 = vmul.f32 %v557, %v558
    %v560 = vsub.f32 1.0, %v559
    %v561 = vmul.f32 %v558, %v560
    %v562 = vadd.f32 %v558, %v561
    %vm563 = vweird.f32 %v557
    %vm564 = vweird.f32 %v558
    %vm565 = vmor %vm563, %vm564
    %v566 = vsel %vm565, %v558, %v562
    %v567 = vand.u32 2147483647, %v557
    %vm568 = vcmp.eq.f32.partialorder %v567, 8.507059e+37
    %v569 = vand.u32 %v557, 2147483648
    %v570 = vor.u32 1.1754944e-38, %v569
    %v571 = vsel %vm568, %v570, %v566
    %v572 = vmul.f32 %v547, %v571
    %v573 = vmin.f32 %v572, 1.0
    %v574 = vmax.f32 %v573, -1.0
    %v575 = vmul.f32 %v333, %v333
    %v576 = vmin.f32 16.0, %v575
    %v577 = vmul.f32 %v576, 2.1237322e-06
    %v578 = vadd.f32 %v577, 0.00028619796
    %v579 = vmul.f32 %v576, %v578
    %v580 = vadd.f32 %v579, 0.0036580483
    %v581 = vmul.f32 %v576, %v580
    %v582 = vadd.f32 %v581, 0.05243302
    %v583 = vmul.f32 %v576, %v582
    %v584 = vadd.f32 %v583, 0.18741608
    %v585 = vmul.f32 %v576, %v584
    %v586 = vadd.f32 %v585, 1.1283791
    %v587 = vmul.f32 %v333, %v586
    %v588 = vmul.f32 %v576, 3.8918573e-05
    %v589 = vadd.f32 %v588, 0.001143296
    %v590 = vmul.f32 %v576, %v589
    %v591 = vadd.f32 %v590, 0.014752088
    %v592 = vmul.f32 %v576, %v591
    %v593 = vadd.f32 %v592, 0.112945676
    %v594 = vmul.f32 %v576, %v593
    %v595 = vadd.f32 %v594, 0.4994258
    %v596 = vmul.f32 %v576, %v595
    %v597 = vadd.f32 %v596, 1.0
    %v598 = vrcp.pop %v597
    %v599 = vmul.f32 %v597, %v598
    %v600 = vsub.f32 1.0, %v599
    %v601 = vmul.f32 %v598, %v600
    %v602 = vadd.f32 %v598, %v601
    %vm603 = vweird.f32 %v597
    %vm604 = vweird.f32 %v598
    %vm605 = vmor %vm603, %vm604
    %v606 = vsel %vm605, %v598, %v602
    %v607 = vand.u32 2147483647, %v597
    %vm608 = vcmp.eq.f32.partialorder %v607, 8.507059e+37
    %v609 = vand.u32 %v597, 2147483648
    %v610 = vor.u32 1.1754944e-38, %v609
    %v611 = vsel %vm608, %v610, %v606
    %v612 = vmul.f32 %v587, %v611
    %v613 = vmin.f32 %v612, 1.0
    %v614 = vmax.f32 %v613, -1.0
    %v615 = vmul.f32 %v334, %v334
    %v616 = vmin.f32 16.0, %v615
    %v617 = vmul.f32 %v616, 2.1237322e-06
    %v618 = vadd.f32 %v617, 0.00028619796
    %v619 = vmul.f32 %v616, %v618
    %v620 = vadd.f32 %v619, 0.0036580483
    %v621 = vmul.f32 %v616, %v620
    %v622 = vadd.f32 %v621, 0.05243302
    %v623 = vmul.f32 %v616, %v622
    %v624 = vadd.f32 %v623, 0.18741608
    %v625 = vmul.f32 %v616, %v624
    %v626 = vadd.f32 %v625, 1.1283791
    %v627 = vmul.f32 %v334, %v626
    %v628 = vmul.f32 %v616, 3.8918573e-05
    %v629 = vadd.f32 %v628, 0.001143296
    %v630 = vmul.f32 %v616, %v629
    %v631 = vadd.f32 %v630, 0.014752088
    %v632 = vmul.f32 %v616, %v631
    %v633 = vadd.f32 %v632, 0.112945676
    %v634 = vmul.f32 %v616, %v633
    %v635 = vadd.f32 %v634, 0.4994258
    %v636 = vmul.f32 %v616, %v635
    %v637 = vadd.f32 %v636, 1.0
    %v638 = vrcp.pop %v637
    %v639 = vmul.f32 %v637, %v638
    %v640 = vsub.f32 1.0, %v639
    %v641 = vmul.f32 %v638, %v640
    %v642 = vadd.f32 %v638, %v641
    %vm643 = vweird.f32 %v637
    %vm644 = vweird.f32 %v638
    %vm645 = vmor %vm643, %vm644
    %v646 = vsel %vm645, %v638, %v642
    %v647 = vand.u32 2147483647, %v637
    %vm648 = vcmp.eq.f32.partialorder %v647, 8.507059e+37
    %v649 = vand.u32 %v637, 2147483648
    %v650 = vor.u32 1.1754944e-38, %v649
    %v651 = vsel %vm648, %v650, %v646
    %v652 = vmul.f32 %v627, %v651
    %v653 = vmin.f32 %v652, 1.0
    %v654 = vmax.f32 %v653, -1.0
    %v655 = vadd.f32 %v374, 1.0
    %v656 = vadd.f32 %v414, 1.0
    %v657 = vadd.f32 %v454, 1.0
    %v658 = vadd.f32 %v494, 1.0
    %v659 = vadd.f32 %v534, 1.0
    %v660 = vadd.f32 %v574, 1.0
    %v661 = vadd.f32 %v614, 1.0
    %v662 = vadd.f32 %v654, 1.0
    %v663 = vmul.f32 %v319, %v655
    %v664 = vmul.f32 %v320, %v656
    %v665 = vmul.f32 %v321, %v657
    %v666 = vmul.f32 %v322, %v658
    %v667 = vmul.f32 %v323, %v659
    %v668 = vmul.f32 %v324, %v660
    %v669 = vmul.f32 %v325, %v661
    %v670 = vmul.f32 %v326, %v662
    %v671 = vld [vmem:[#allocation2] sm:$0xff]
    %v672 = vld [vmem:[#allocation2 + $0x8] sm:$0xff]
    %v673 = vpack.c.bf16 %v667, %v663
    %v674 = vpack.c.bf16 %v668, %v664
    %v675 = vpack.c.bf16 %v669, %v665
    %v676 = vpack.c.bf16 %v670, %v666
    %v677 = vld [vmem:[#allocation8] sm:$0xf]
    %v678 = vld [vmem:[#allocation8 + $0x4] sm:$0xf]
    %v679 = vld [vmem:[#allocation8 + $0x8] sm:$0xf]
    %v680 = vld [vmem:[#allocation8 + $0xc] sm:$0xf]
    %v681 = vld [vmem:[#allocation8 + $0x10] sm:$0xf]
    %v682 = vld [vmem:[#allocation8 + $0x14] sm:$0xf]
    %v683 = vld [vmem:[#allocation8 + $0x18] sm:$0xf]
    %v684 = vld [vmem:[#allocation8 + $0x1c] sm:$0xf]
    %v685 = vld [vmem:[#allocation8 + $0x20] sm:$0xf]
    %v686 = vld [vmem:[#allocation8 + $0x24] sm:$0xf]
    %v687 = vld [vmem:[#allocation8 + $0x28] sm:$0xf]
    %v688 = vld [vmem:[#allocation8 + $0x2c] sm:$0xf]
    %v689 = vld [vmem:[#allocation8 + $0x30] sm:$0xf]
    %v690 = vld [vmem:[#allocation8 + $0x34] sm:$0xf]
    %v691 = vld [vmem:[#allocation8 + $0x38] sm:$0xf]
    %v692 = vld [vmem:[#allocation8 + $0x3c] sm:$0xf]
    %v693 = vld [vmem:[#allocation8 + $0x40] sm:$0xf]
    %v694 = vld [vmem:[#allocation8 + $0x44] sm:$0xf]
    %v695 = vld [vmem:[#allocation8 + $0x48] sm:$0xf]
    %v696 = vld [vmem:[#allocation8 + $0x4c] sm:$0xf]
    %v697 = vld [vmem:[#allocation8 + $0x50] sm:$0xf]
    %v698 = vld [vmem:[#allocation8 + $0x54] sm:$0xf]
    %v699 = vld [vmem:[#allocation8 + $0x58] sm:$0xf]
    %v700 = vld [vmem:[#allocation8 + $0x5c] sm:$0xf]
    %v701 = vld [vmem:[#allocation8 + $0x60] sm:$0xf]
    %v702 = vld [vmem:[#allocation8 + $0x64] sm:$0xf]
    %v703 = vld [vmem:[#allocation8 + $0x68] sm:$0xf]
    %v704 = vld [vmem:[#allocation8 + $0x6c] sm:$0xf]
    %v705 = vld [vmem:[#allocation8 + $0x70] sm:$0xf]
    %v706 = vld [vmem:[#allocation8 + $0x74] sm:$0xf]
    %v707 = vld [vmem:[#allocation8 + $0x78] sm:$0xf]
    %v708 = vld [vmem:[#allocation8 + $0x7c] sm:$0xf]
    %v709 = vld [vmem:[#allocation8 + $0x80] sm:$0xf]
    %v710 = vld [vmem:[#allocation8 + $0x84] sm:$0xf]
    %v711 = vld [vmem:[#allocation8 + $0x88] sm:$0xf]
    %v712 = vld [vmem:[#allocation8 + $0x8c] sm:$0xf]
    %v713 = vld [vmem:[#allocation8 + $0x90] sm:$0xf]
    %v714 = vld [vmem:[#allocation8 + $0x94] sm:$0xf]
    %v715 = vld [vmem:[#allocation8 + $0x98] sm:$0xf]
    %v716 = vld [vmem:[#allocation8 + $0x9c] sm:$0xf]
    %v717 = vld [vmem:[#allocation8 + $0xa0] sm:$0xf]
    %v718 = vld [vmem:[#allocation8 + $0xa4] sm:$0xf]
    %v719 = vld [vmem:[#allocation8 + $0xa8] sm:$0xf]
    %v720 = vld [vmem:[#allocation8 + $0xac] sm:$0xf]
    %v721 = vld [vmem:[#allocation8 + $0xb0] sm:$0xf]
    %v722 = vld [vmem:[#allocation8 + $0xb4] sm:$0xf]
    %v723 = vld [vmem:[#allocation8 + $0xb8] sm:$0xf]
    %v724 = vld [vmem:[#allocation8 + $0xbc] sm:$0xf]
    %v725 = vld [vmem:[#allocation8 + $0xc0] sm:$0xf]
    %v726 = vld [vmem:[#allocation8 + $0xc4] sm:$0xf]
    %v727 = vld [vmem:[#allocation8 + $0xc8] sm:$0xf]
    %v728 = vld [vmem:[#allocation8 + $0xcc] sm:$0xf]
    %v729 = vld [vmem:[#allocation8 + $0xd0] sm:$0xf]
    %v730 = vld [vmem:[#allocation8 + $0xd4] sm:$0xf]
    %v731 = vld [vmem:[#allocation8 + $0xd8] sm:$0xf]
    %v732 = vld [vmem:[#allocation8 + $0xdc] sm:$0xf]
    %v733 = vld [vmem:[#allocation8 + $0xe0] sm:$0xf]
    %v734 = vld [vmem:[#allocation8 + $0xe4] sm:$0xf]
    %v735 = vld [vmem:[#allocation8 + $0xe8] sm:$0xf]
    %v736 = vld [vmem:[#allocation8 + $0xec] sm:$0xf]
    %v737 = vld [vmem:[#allocation8 + $0xf0] sm:$0xf]
    %v738 = vld [vmem:[#allocation8 + $0xf4] sm:$0xf]
    %v739 = vld [vmem:[#allocation8 + $0xf8] sm:$0xf]
    %v740 = vld [vmem:[#allocation8 + $0xfc] sm:$0xf]
    %v805 = vunpack.c.l.b16 %v677
    %v806 = vunpack.c.l.b16 %v678
    %v807 = vunpack.c.l.b16 %v679
    %v808 = vunpack.c.l.b16 %v680
    %v809 = vunpack.c.l.b16 %v681
    %v810 = vunpack.c.l.b16 %v682
    %v811 = vunpack.c.l.b16 %v683
    %v812 = vunpack.c.l.b16 %v684
    %v813 = vunpack.c.l.b16 %v685
    %v814 = vunpack.c.l.b16 %v686
    %v815 = vunpack.c.l.b16 %v687
    %v816 = vunpack.c.l.b16 %v688
    %v817 = vunpack.c.l.b16 %v689
    %v818 = vunpack.c.l.b16 %v690
    %v819 = vunpack.c.l.b16 %v691
    %v820 = vunpack.c.l.b16 %v692
    %v821 = vunpack.c.l.b16 %v693
    %v822 = vunpack.c.l.b16 %v694
    %v823 = vunpack.c.l.b16 %v695
    %v824 = vunpack.c.l.b16 %v696
    %v825 = vunpack.c.l.b16 %v697
    %v826 = vunpack.c.l.b16 %v698
    %v827 = vunpack.c.l.b16 %v699
    %v828 = vunpack.c.l.b16 %v700
    %v829 = vunpack.c.l.b16 %v701
    %v830 = vunpack.c.l.b16 %v702
    %v831 = vunpack.c.l.b16 %v703
    %v832 = vunpack.c.l.b16 %v704
    %v833 = vunpack.c.l.b16 %v705
    %v834 = vunpack.c.l.b16 %v706
    %v835 = vunpack.c.l.b16 %v707
    %v836 = vunpack.c.l.b16 %v708
    %v837 = vunpack.c.l.b16 %v709
    %v838 = vunpack.c.l.b16 %v710
    %v839 = vunpack.c.l.b16 %v711
    %v840 = vunpack.c.l.b16 %v712
    %v841 = vunpack.c.l.b16 %v713
    %v842 = vunpack.c.l.b16 %v714
    %v843 = vunpack.c.l.b16 %v715
    %v844 = vunpack.c.l.b16 %v716
    %v845 = vunpack.c.l.b16 %v717
    %v846 = vunpack.c.l.b16 %v718
    %v847 = vunpack.c.l.b16 %v719
    %v848 = vunpack.c.l.b16 %v720
    %v849 = vunpack.c.l.b16 %v721
    %v850 = vunpack.c.l.b16 %v722
    %v851 = vunpack.c.l.b16 %v723
    %v852 = vunpack.c.l.b16 %v724
    %v853 = vunpack.c.l.b16 %v725
    %v854 = vunpack.c.l.b16 %v726
    %v855 = vunpack.c.l.b16 %v727
    %v856 = vunpack.c.l.b16 %v728
    %v857 = vunpack.c.l.b16 %v729
    %v858 = vunpack.c.l.b16 %v730
    %v859 = vunpack.c.l.b16 %v731
    %v860 = vunpack.c.l.b16 %v732
    %v861 = vunpack.c.l.b16 %v733
    %v862 = vunpack.c.l.b16 %v734
    %v863 = vunpack.c.l.b16 %v735
    %v864 = vunpack.c.l.b16 %v736
    %v865 = vunpack.c.l.b16 %v737
    %v866 = vunpack.c.l.b16 %v738
    %v867 = vunpack.c.l.b16 %v739
    %v868 = vunpack.c.l.b16 %v740
    %v869 = vpack.c.b16 %v806, %v805
    %v870 = vpack.c.b16 %v808, %v807
    %v871 = vpack.c.b16 %v810, %v809
    %v872 = vpack.c.b16 %v812, %v811
    %v873 = vpack.c.b16 %v814, %v813
    %v874 = vpack.c.b16 %v816, %v815
    %v875 = vpack.c.b16 %v818, %v817
    %v876 = vpack.c.b16 %v820, %v819
    %v877 = vpack.c.b16 %v822, %v821
    %v878 = vpack.c.b16 %v824, %v823
    %v879 = vpack.c.b16 %v826, %v825
    %v880 = vpack.c.b16 %v828, %v827
    %v881 = vpack.c.b16 %v830, %v829
    %v882 = vpack.c.b16 %v832, %v831
    %v883 = vpack.c.b16 %v834, %v833
    %v884 = vpack.c.b16 %v836, %v835
    %v885 = vpack.c.b16 %v838, %v837
    %v886 = vpack.c.b16 %v840, %v839
    %v887 = vpack.c.b16 %v842, %v841
    %v888 = vpack.c.b16 %v844, %v843
    %v889 = vpack.c.b16 %v846, %v845
    %v890 = vpack.c.b16 %v848, %v847
    %v891 = vpack.c.b16 %v850, %v849
    %v892 = vpack.c.b16 %v852, %v851
    %v893 = vpack.c.b16 %v854, %v853
    %v894 = vpack.c.b16 %v856, %v855
    %v895 = vpack.c.b16 %v858, %v857
    %v896 = vpack.c.b16 %v860, %v859
    %v897 = vpack.c.b16 %v862, %v861
    %v898 = vpack.c.b16 %v864, %v863
    %v899 = vpack.c.b16 %v866, %v865
    %v900 = vpack.c.b16 %v868, %v867
    %933 = vmatpush.bf16.msra.mxu0 %v876
    %934 = vmatpush.bf16.msra.mxu0 %v875
    %935 = vmatpush.bf16.msra.mxu0 %v874
    %936 = vmatpush.bf16.msra.mxu0 %v873
    %937 = vmatpush.bf16.msra.mxu0 %v872
    %938 = vmatpush.bf16.msra.mxu0 %v871
    %939 = vmatpush.bf16.msra.mxu0 %v870
    %940 = vmatpush.bf16.msra.mxu0 %v869
    %941 = vmatmul.bf16.gmra.mxu0 %v673
    %v942 = vpop.f32.mrf.mxu0
    %v943 = vadd.f32 0.0, %v942
    %v944 = vpop.f32.mrf.mxu0
    %v945 = vadd.f32 0.0, %v944
    %946 = vdwg.mxu0
    %947 = vmatpush.bf16.msra.mxu0 %v884
    %948 = vmatpush.bf16.msra.mxu0 %v883
    %949 = vmatpush.bf16.msra.mxu0 %v882
    %950 = vmatpush.bf16.msra.mxu0 %v881
    %951 = vmatpush.bf16.msra.mxu0 %v880
    %952 = vmatpush.bf16.msra.mxu0 %v879
    %953 = vmatpush.bf16.msra.mxu0 %v878
    %954 = vmatpush.bf16.msra.mxu0 %v877
    %955 = vmatmul.bf16.gmra.mxu0 %v674
    %v956 = vpop.f32.mrf.mxu0
    %v957 = vadd.f32 %v943, %v956
    %v958 = vpop.f32.mrf.mxu0
    %v959 = vadd.f32 %v945, %v958
    %960 = vdwg.mxu0
    %961 = vmatpush.bf16.msra.mxu0 %v892
    %962 = vmatpush.bf16.msra.mxu0 %v891
    %963 = vmatpush.bf16.msra.mxu0 %v890
    %964 = vmatpush.bf16.msra.mxu0 %v889
    %965 = vmatpush.bf16.msra.mxu0 %v888
    %966 = vmatpush.bf16.msra.mxu0 %v887
    %967 = vmatpush.bf16.msra.mxu0 %v886
    %968 = vmatpush.bf16.msra.mxu0 %v885
    %969 = vmatmul.bf16.gmra.mxu0 %v675
    %v970 = vpop.f32.mrf.mxu0
    %v971 = vadd.f32 %v957, %v970
    %v972 = vpop.f32.mrf.mxu0
    %v973 = vadd.f32 %v959, %v972
    %974 = vdwg.mxu0
    %975 = vmatpush.bf16.msra.mxu0 %v900
    %976 = vmatpush.bf16.msra.mxu0 %v899
    %977 = vmatpush.bf16.msra.mxu0 %v898
    %978 = vmatpush.bf16.msra.mxu0 %v897
    %979 = vmatpush.bf16.msra.mxu0 %v896
    %980 = vmatpush.bf16.msra.mxu0 %v895
    %981 = vmatpush.bf16.msra.mxu0 %v894
    %982 = vmatpush.bf16.msra.mxu0 %v893
    %983 = vmatmul.bf16.gmra.mxu0 %v676
    %v984 = vpop.f32.mrf.mxu0
    %v985 = vadd.f32 %v971, %v984
    %v986 = vpop.f32.mrf.mxu0
    %v987 = vadd.f32 %v973, %v986
    %988 = vdwg.mxu0
    %v989 = vadd.f32 %v671, %v985
    %v990 = vadd.f32 %v672, %v987
    %991 = vst [vmem:[#allocation2] sm:$0xff] %v989
    %992 = vst [vmem:[#allocation2 + $0x8] sm:$0xff] %v990
    // Predicated region
    $region30: #{mlp_forward.1} parent=1 // pred_check
      %p993 = pneg %p62
    $region31: #{mlp_forward.1} parent=1 // pred_check_branch
      %995 = sbr.rel (%p993) target = $region33
    $region32: #{mlp_forward.1} parent=1 // pred_region
      %v996 = vld [vmem:[#allocation2] sm:$0xff]
      %v997 = vld [vmem:[#allocation2 + $0x8] sm:$0xff]
      %998 = vst [vmem:[#allocation9] sm:$0xff] %v996
      %999 = vst [vmem:[#allocation9 + $0x8] sm:$0xff] %v997
    $region33: #{mlp_forward.1} parent=1 // pred_fallthru
      _
    // Predicated region
    $region34: #{mlp_forward.1} parent=1 // pred_check
      _
    $region35: #{mlp_forward.1} parent=1 // pred_check_branch
      %1001 = sbr.rel (0) target = $region37
    $region36: #{mlp_forward.1} parent=1 // pred_region
      %1003 = vsyncadd [#allocation5], 0
      %s1004 = sshll.u32 [#allocation9], 4
      %s1005 = int_to_ptr.vmem [resolvable:$true] %s1004
      %s1006 = sshll.u32 %s3, 4
      %s1007 = int_to_ptr.hbm [resolvable:$true] %s1006
      %1012 = dma.vmem_to_hbm [thread:$0]  %s1005, 256, %s1007, [#allocation5], 128, 128, 8
    $region37: #{mlp_forward.1} parent=1 // pred_fallthru
      _
    // Predicated region
    $region38: #{mlp_forward.1} parent=1 // pred_check
      _
    $region39: #{mlp_forward.1} parent=1 // pred_check_branch
      %1014 = sbr.rel (0) target = $region41
    $region40: #{mlp_forward.1} parent=1 // pred_region
      %1016 = dma.done [#allocation5], 256
    $region41: #{mlp_forward.1} parent=1 // pred_fallthru
      _
    %1017 = vsyncpa [#allocation4], 1
    %1018 = vsyncpa [#allocation7], 1
    %1019 = vsyncpa [#allocation5], 1

</llo_original>
